<compile_context>
chip_gen: v6e
topology: v6e:2x2x1
jax: 0.10.0
libtpu: 0.0.40
codegen_flags: <defaults>
</compile_context>

<pallas_src>
import functools
import math

import jax
import jax.numpy as jnp
from jax.experimental import pallas as pl
from jax.experimental.pallas import tpu as pltpu


_TRANSCENDENTAL_ACTS = ("GELU", "nn.GELU", "SiLU", "nn.SiLU",
                        "Sigmoid", "nn.Sigmoid", "Tanh", "nn.Tanh")


def _apply_act(y, act):
    """Mirror the torch `act` argument (nn.ReLU, nn.GELU, ... or None=Identity)."""
    if act is None or act in ("Identity", "nn.Identity"):
        return y
    if act in ("ReLU", "nn.ReLU"):
        return jnp.maximum(y, 0.0)
    if act in ("GELU", "nn.GELU"):
        # torch.nn.GELU default is the exact erf form.
        return jax.nn.gelu(y, approximate=False)
    if act in ("SiLU", "nn.SiLU"):
        return y * jax.nn.sigmoid(y)
    if act in ("Sigmoid", "nn.Sigmoid"):
        return jax.nn.sigmoid(y)
    if act in ("Tanh", "nn.Tanh"):
        return jnp.tanh(y)
    # TODO(synk): torch's `eval(f'nn.{act}')` accepts any nn.* module; only the
    # common elementwise activations are mapped here.
    raise ValueError(f"unsupported activation: {act}")


def _round_up(x, m):
    return ((x + m - 1) // m) * m


def _cdiv(a, b):
    return -(-a // b)


def _pick_tile(dim, target, align):
    """Balanced tile <= target, multiple of `align`, minimizing padding."""
    dim_al = _round_up(max(dim, 1), align)
    if dim_al <= target:
        return dim_al
    n_blocks = _cdiv(dim_al, target)
    return _round_up(_cdiv(dim_al, n_blocks), align)


# Per-generation defaults: output tile (tm x tn), reduction tile tk, scoped
# VMEM limit, and TensorCores per chip (for the megacore work-split check).
_TILE_CONFIGS = {
    "v5e": dict(tm=512,  tn=512,  tk=1024, vmem_limit=32 << 20, num_cores=1),
    "v6e": dict(tm=1536, tn=1536, tk=1024, vmem_limit=64 << 20, num_cores=1),
    "v7x": dict(tm=1280, tn=1280, tk=1024, vmem_limit=48 << 20, num_cores=2),
}
_DEFAULT_CONFIG = dict(tm=1024, tn=1024, tk=1024, vmem_limit=48 << 20, num_cores=2)


def _tpu_generation():
    try:
        kind = jax.devices()[0].device_kind.lower()
    except Exception:  # pragma: no cover - never let detection break the call
        return None
    if "v5 lite" in kind or "v5e" in kind or "v5lite" in kind:
        return "v5e"
    if "v6" in kind:
        return "v6e"
    if "7" in kind:
        return "v7x"
    return None


def _linear_kernel(x_ref, w_ref, b_ref, o_ref, acc_ref, *, act):
    # x_ref: (tm, tk) bf16   w_ref: (tk, tn) bf16 (weight pre-transposed)
    # b_ref: (1, tn)         o_ref: (tm, tn)      acc_ref: (tm, tn) f32
    k = pl.program_id(2)

    @pl.when(k == 0)
    def _():
        acc_ref[...] = jnp.zeros_like(acc_ref)

    acc_ref[...] += jnp.dot(x_ref[...], w_ref[...],
                            preferred_element_type=jnp.float32)

    @pl.when(k == pl.num_programs(2) - 1)
    def _():
        y = acc_ref[...] + b_ref[...].astype(jnp.float32)  # bias added once
        o_ref[...] = _apply_act(y, act).astype(o_ref.dtype)


def _linear_kernel_single_k(x_ref, w_ref, b_ref, o_ref, *, act):
    # K fits in one tile: skip the accumulator scratch and zero-init entirely.
    y = jnp.dot(x_ref[...], w_ref[...], preferred_element_type=jnp.float32)
    y = y + b_ref[...].astype(jnp.float32)
    o_ref[...] = _apply_act(y, act).astype(o_ref.dtype)


def pallas_linear(x, weight, bias, act=None, *, compute_dtype=jnp.bfloat16,
                  tm=None, tn=None, tk=None, weight_buffering=2):
    """x: (..., c1); weight: (c2, c1) torch layout; bias: (c2,). Returns (..., c2)."""
    c2, c1 = weight.shape
    lead = x.shape[:-1]
    m = math.prod(lead) if lead else 1
    out_dtype = x.dtype

    cfg = _TILE_CONFIGS.get(_tpu_generation(), _DEFAULT_CONFIG)
    tm = tm or cfg["tm"]
    tn = tn or cfg["tn"]
    tk = tk or cfg["tk"]

    # Balanced, alignment-respecting tiles (M: 16 for bf16 sublane packing;
    # N/K: 128 lanes) — avoids padding a dim up to a whole oversized tile.
    tm = _pick_tile(m, tm, 16)
    tn = _pick_tile(c2, tn, 128)
    tk = _pick_tile(c1, tk, 128)

    # Megacore (v7x): if everything fits a single (i, j) tile, split the larger
    # parallel axis so both TensorCores get work.
    num_cores = cfg["num_cores"]
    if num_cores >= 2:
        m_al = _round_up(m, 16)
        n_al = _round_up(c2, 128)
        if _cdiv(m_al, tm) * _cdiv(n_al, tn) < num_cores:
            if n_al >= num_cores * 128:
                tn = _round_up(_cdiv(n_al, num_cores), 128)
            elif m_al >= num_cores * 16:
                tm = _round_up(_cdiv(m_al, num_cores), 16)

    m_pad = _round_up(m, tm)
    n_pad = _round_up(c2, tn)
    k_pad = _round_up(c1, tk)
    i_blocks, j_blocks, k_blocks = m_pad // tm, n_pad // tn, k_pad // tk

    # bf16 operands (MXU peak dtype); weight pre-transposed to (c1, c2) so the
    # kernel contracts with a plain row-major MXU matmul (no per-tile XLU
    # transpose). Cast + transpose + pad fuse into one XLA pass over HBM.
    x2d = x.reshape(m, c1).astype(compute_dtype)
    wt = weight.T.astype(compute_dtype)                       # (c1, c2)
    if (m_pad, k_pad) != (m, c1):
        x2d = jnp.pad(x2d, ((0, m_pad - m), (0, k_pad - c1)))
    if (k_pad, n_pad) != (c1, c2):
        wt = jnp.pad(wt, ((0, k_pad - c1), (0, n_pad - c2)))
    b2d = bias.reshape(1, c2)
    if n_pad != c2:
        b2d = jnp.pad(b2d, ((0, 0), (0, n_pad - c2)))

    # Honest HBM-traffic estimate: x is re-streamed per N block, weight per M
    # block, plus bias read and output write.
    in_elt = jnp.dtype(compute_dtype).itemsize
    out_elt = jnp.dtype(out_dtype).itemsize
    b_elt = jnp.dtype(b2d.dtype).itemsize
    cost = pl.CostEstimate(
        flops=2 * m_pad * k_pad * n_pad,
        transcendentals=(m_pad * n_pad if act in _TRANSCENDENTAL_ACTS else 0),
        bytes_accessed=(m_pad * k_pad * in_elt * j_blocks
                        + k_pad * n_pad * in_elt * i_blocks
                        + n_pad * b_elt
                        + m_pad * n_pad * out_elt),
    )

    if k_blocks == 1:
        kernel = functools.partial(_linear_kernel_single_k, act=act)
        grid = (i_blocks, j_blocks)
        in_specs = [
            pl.BlockSpec((tm, tk), lambda i, j: (i, 0)),     # x tile
            pl.BlockSpec((tk, tn), lambda i, j: (0, j)),     # weight tile (c1, c2)
            pl.BlockSpec((1, tn), lambda i, j: (0, j)),      # bias tile
        ]
        out_spec = pl.BlockSpec((tm, tn), lambda i, j: (i, j))
        scratch = []
        dims = ("parallel", "parallel")
    else:
        kernel = functools.partial(_linear_kernel, act=act)
        grid = (i_blocks, j_blocks, k_blocks)
        w_spec = pl.BlockSpec((tk, tn), lambda i, j, k: (k, j))
        if weight_buffering != 2 and hasattr(pl, "Buffered"):
            # Optional deeper buffering of the dominant weight stream.
            w_spec = pl.BlockSpec((tk, tn), lambda i, j, k: (k, j),
                                  pipeline_mode=pl.Buffered(weight_buffering))
        in_specs = [
            pl.BlockSpec((tm, tk), lambda i, j, k: (i, k)),  # x tile
            w_spec,                                          # weight tile (c1, c2)
            pl.BlockSpec((1, tn), lambda i, j, k: (0, j)),   # bias tile
        ]
        out_spec = pl.BlockSpec((tm, tn), lambda i, j, k: (i, j))
        scratch = [pltpu.VMEM((tm, tn), jnp.float32)]
        dims = ("parallel", "parallel", "arbitrary")

    out = pl.pallas_call(
        kernel,
        out_shape=jax.ShapeDtypeStruct((m_pad, n_pad), out_dtype),
        grid_spec=pltpu.PrefetchScalarGridSpec(
            num_scalar_prefetch=0,
            grid=grid,
            in_specs=in_specs,
            out_specs=out_spec,
            scratch_shapes=scratch,
        ),
        compiler_params=pltpu.CompilerParams(
            dimension_semantics=dims,
            vmem_limit_bytes=cfg["vmem_limit"],
        ),
        cost_estimate=cost,
    )(x2d, wt, b2d)

    out = out[:m, :c2]
    return out.reshape(*lead, c2)


def init_linear_params(key, c1, c2, dtype=jnp.float32):
    """Deterministic synthetic init (matches nn.Linear parameter shapes)."""
    kw, kb = jax.random.split(key)
    bound = 1.0 / (c1 ** 0.5)
    weight = jax.random.uniform(kw, (c2, c1), dtype, minval=-bound, maxval=bound)
    bias = jax.random.uniform(kb, (c2,), dtype, minval=-bound, maxval=bound)
    return weight, bias


if __name__ == "__main__":
    key = jax.random.PRNGKey(0)
    kx, kp = jax.random.split(key)

    batch, seq, c1, c2 = 2, 8, 32, 64
    x = jax.random.normal(kx, (batch, seq, c1), jnp.float32)
    weight, bias = init_linear_params(kp, c1, c2)

    # act="ReLU" exercises the fused activation path; act=None == nn.Identity.
    y = pallas_linear(x, weight, bias, act="ReLU")
    y = jax.block_until_ready(y)

    # Reference check. Operands are computed in bf16 (f32 accumulation), so
    # compare against the f32 reference with bf16-appropriate tolerances.
    y_ref = jnp.maximum(x @ weight.T + bias, 0.0)
    assert y.shape == (batch, seq, c2)
    assert jnp.allclose(y, y_ref, atol=2e-2, rtol=2e-2)

    # Identity path.
    y2 = jax.block_until_ready(pallas_linear(x, weight, bias, act=None))
    assert jnp.allclose(y2, x @ weight.T + bias, atol=2e-2, rtol=2e-2)

    # Full-precision path still available (no bf16 cast) for exactness checks.
    y3 = jax.block_until_ready(
        pallas_linear(x, weight, bias, act="ReLU", compute_dtype=jnp.float32))
    assert jnp.allclose(y3, y_ref, atol=1e-5, rtol=1e-5)

    print("KERNEL_OK")
</pallas_src>

<mosaic_0001>
module attributes {stable_mosaic.version = 11 : i64} {
  func.func @_linear_kernel_single_k(%arg0: i32, %arg1: i32, %arg2: memref<16x128xbf16, #tpu.memory_space<vmem>>, %arg3: memref<128x128xbf16, #tpu.memory_space<vmem>>, %arg4: memref<1x128xf32, #tpu.memory_space<vmem>>, %arg5: memref<16x128xf32, #tpu.memory_space<vmem>>) attributes {dimension_semantics = [#tpu.dimension_semantics<parallel>, #tpu.dimension_semantics<parallel>], iteration_bounds = array<i64: 1, 1>, scalar_prefetch = 0 : i64, scratch_operands = 0 : i64, tpu.core_type = #tpu.core_type<tc>, window_params = [{transform_indices = @transform_0, window_bounds = array<i64: 16, 128>}, {transform_indices = @transform_1, window_bounds = array<i64: 128, 128>}, {transform_indices = @transform_2, window_bounds = array<i64: 1, 128>}, {transform_indices = @transform_3, window_bounds = array<i64: 16, 128>}]} {
    %c0 = arith.constant 0 : index
    %c0_0 = arith.constant 0 : index
    %0 = vector.load %arg2[%c0, %c0_0] : memref<16x128xbf16, #tpu.memory_space<vmem>>, vector<16x128xbf16>
    %c0_1 = arith.constant 0 : index
    %c0_2 = arith.constant 0 : index
    %1 = vector.load %arg3[%c0_1, %c0_2] : memref<128x128xbf16, #tpu.memory_space<vmem>>, vector<128x128xbf16>
    %cst = arith.constant dense<0.000000e+00> : vector<16x128xf32>
    %2 = tpu.matmul %0, %1, %cst {dimension_numbers = #tpu.dot_dimension_numbers<[1], [0], [0], [1], [0, 0, 1, 1], [], []>} : vector<16x128xbf16>, vector<128x128xbf16>, vector<16x128xf32> -> vector<16x128xf32>
    %c0_3 = arith.constant 0 : index
    %c0_4 = arith.constant 0 : index
    %3 = vector.load %arg4[%c0_3, %c0_4] : memref<1x128xf32, #tpu.memory_space<vmem>>, vector<1x128xf32>
    %4 = vector.broadcast %3 : vector<1x128xf32> to vector<16x128xf32>
    %5 = arith.addf %2, %4 : vector<16x128xf32>
    %cst_5 = arith.constant 0.000000e+00 : f32
    %6 = vector.broadcast %cst_5 : f32 to vector<16x128xf32>
    %7 = arith.maximumf %5, %6 : vector<16x128xf32>
    %c0_6 = arith.constant 0 : index
    %c0_7 = arith.constant 0 : index
    %8 = vector.load %arg5[%c0_6, %c0_7] : memref<16x128xf32, #tpu.memory_space<vmem>>, vector<16x128xf32>
    tpu.vector_store %arg5[%c0_6, %c0_7], %7 {strides = array<i32>} : memref<16x128xf32, #tpu.memory_space<vmem>>, vector<16x128xf32>,
    return
  }
  func.func @transform_0(%arg0: i32, %arg1: i32) -> (i32, i32) {
    %c0_i32 = arith.constant 0 : i32
    %c0_i32_0 = arith.constant 0 : i32
    return %arg0, %c0_i32 : i32, i32
  }
  func.func @transform_1(%arg0: i32, %arg1: i32) -> (i32, i32) {
    %c0_i32 = arith.constant 0 : i32
    %c0_i32_0 = arith.constant 0 : i32
    return %c0_i32, %arg1 : i32, i32
  }
  func.func @transform_2(%arg0: i32, %arg1: i32) -> (i32, i32) {
    %c0_i32 = arith.constant 0 : i32
    %c0_i32_0 = arith.constant 0 : i32
    return %c0_i32, %arg1 : i32, i32
  }
  func.func @transform_3(%arg0: i32, %arg1: i32) -> (i32, i32) {
    %c0_i32 = arith.constant 0 : i32
    return %arg0, %arg1 : i32, i32
  }
}

</mosaic_0001>

<llo_original>
// kernel: tpu_custom_call.1
$region0: #{tpu_custom_call.1}
  #allocation0 [shape = 'u32[]', space=smem, size = 0x4, offset = 0x4, fixed_abs, tag = 'smem constant byte address 0x4 - core index']
  #allocation1 [shape = 'u32[144,128]{1,0:T(1,128)}', space=vmem, size = 0x12000, scoped, tag = 'internal scratch']
  %s0 = inlined_call_operand.hbm [shape: bf16[16,128], index: 0, kind: input, shape index: {}]
  %s1 = inlined_call_operand.hbm [shape: bf16[128,128], index: 1, kind: input, shape index: {}]
  %s2 = inlined_call_operand.vmem [shape: f32[1,128], index: 2, kind: input, shape index: {}]
  %s3 = inlined_call_operand.hbm [shape: f32[16,128], index: 3, kind: output, shape index: {}]
  %s4 = sld [smem:[#allocation0]]
  $region30: #{tpu_custom_call.1} parent=0
    _
  %s6 = ssub.s32 1, %s4
  %s7 = scalar_select 0, %s6, %s4
  $region1: #{tpu_custom_call.1} parent=0
    #allocation2 [shape = 'u8[4096]{0}', space=vmem, size = 0x1000, scoped, tag = 'input window, operand 0, single buffered']
    #allocation3 [shape = 's32[1]{0}', space=sflag, size = 0x4, scoped, tag = 'scoped memory for tpu_custom_call.1']
    #allocation4 [shape = 's32[1]{0}', space=sflag, size = 0x4, scoped, tag = 'scoped memory for tpu_custom_call.1']
    #allocation5 [shape = 'u8[32768]{0}', space=vmem, size = 0x8000, scoped, tag = 'input window, operand 1, single buffered']
    #allocation6 [shape = 's32[1]{0}', space=sflag, size = 0x4, scoped, tag = 'scoped memory for tpu_custom_call.1']
    #allocation7 [shape = 'u8[8192]{0}', space=vmem, size = 0x2000, scoped, tag = 'output window, operand 0, single buffered']
    %8 = vsyncpa [#allocation3], 0
    %9 = vsyncpa [#allocation6], 0
    %10 = vsyncpa [#allocation4], 0
    // Predicated region
    $region2: #{tpu_custom_call.1} parent=1 // pred_check
      _
    $region3: #{tpu_custom_call.1} parent=1 // pred_check_branch
      %12 = sbr.rel (0) target = $region5
    $region4: #{tpu_custom_call.1} parent=1 // pred_region
      %s14 = ssub.s32 128, 128
      %15 = vsyncadd [#allocation3], %s14
      %s16 = sshll.u32 [#allocation2], 4
      %s17 = int_to_ptr.vmem [resolvable:$true] %s16
      %22 = dma.hbm_to_vmem [thread:$0]  %s0, 128, %s17, [#allocation3], 64, 64, 4
    $region5: #{tpu_custom_call.1} parent=1 // pred_fallthru
      _
    // Predicated region
    $region6: #{tpu_custom_call.1} parent=1 // pred_check
      _
    $region7: #{tpu_custom_call.1} parent=1 // pred_check_branch
      %24 = sbr.rel (0) target = $region9
    $region8: #{tpu_custom_call.1} parent=1 // pred_region
      %s26 = ssub.s32 1024, 1024
      %27 = vsyncadd [#allocation6], %s26
      %s28 = sshll.u32 [#allocation5], 4
      %s29 = int_to_ptr.vmem [resolvable:$true] %s28
      %34 = dma.hbm_to_vmem [thread:$0]  %s1, 1024, %s29, [#allocation6], 64, 64, 4
    $region9: #{tpu_custom_call.1} parent=1 // pred_fallthru
      _
    // Predicated region
    $region10: #{tpu_custom_call.1} parent=1 // pred_check
      _
    $region11: #{tpu_custom_call.1} parent=1 // pred_check_branch
      %36 = sbr.rel (0) target = $region13
    $region12: #{tpu_custom_call.1} parent=1 // pred_region
      _
    $region13: #{tpu_custom_call.1} parent=1 // pred_fallthru
      _
    // Predicated region
    $region14: #{tpu_custom_call.1} parent=1 // pred_check
      _
    $region15: #{tpu_custom_call.1} parent=1 // pred_check_branch
      %38 = sbr.rel (0) target = $region17
    $region16: #{tpu_custom_call.1} parent=1 // pred_region
      %39 = dma.done [#allocation3], 128
    $region17: #{tpu_custom_call.1} parent=1 // pred_fallthru
      _
    // Predicated region
    $region18: #{tpu_custom_call.1} parent=1 // pred_check
      _
    $region19: #{tpu_custom_call.1} parent=1 // pred_check_branch
      %41 = sbr.rel (0) target = $region21
    $region20: #{tpu_custom_call.1} parent=1 // pred_region
      %42 = dma.done [#allocation6], 1024
    $region21: #{tpu_custom_call.1} parent=1 // pred_fallthru
      _
    %v44 = vld [vmem:[#allocation2] sm:$0xf]
    %v45 = vld [vmem:[#allocation2 + $0x4] sm:$0xf]
    %v46 = vld [vmem:[#allocation5] sm:$0xf]
    %v47 = vld [vmem:[#allocation5 + $0x4] sm:$0xf]
    %v48 = vld [vmem:[#allocation5 + $0x8] sm:$0xf]
    %v49 = vld [vmem:[#allocation5 + $0xc] sm:$0xf]
    %v50 = vld [vmem:[#allocation5 + $0x10] sm:$0xf]
    %v51 = vld [vmem:[#allocation5 + $0x14] sm:$0xf]
    %v52 = vld [vmem:[#allocation5 + $0x18] sm:$0xf]
    %v53 = vld [vmem:[#allocation5 + $0x1c] sm:$0xf]
    %v54 = vld [vmem:[#allocation5 + $0x20] sm:$0xf]
    %v55 = vld [vmem:[#allocation5 + $0x24] sm:$0xf]
    %v56 = vld [vmem:[#allocation5 + $0x28] sm:$0xf]
    %v57 = vld [vmem:[#allocation5 + $0x2c] sm:$0xf]
    %v58 = vld [vmem:[#allocation5 + $0x30] sm:$0xf]
    %v59 = vld [vmem:[#allocation5 + $0x34] sm:$0xf]
    %v60 = vld [vmem:[#allocation5 + $0x38] sm:$0xf]
    %v61 = vld [vmem:[#allocation5 + $0x3c] sm:$0xf]
    %v62 = vld [vmem:[%s2] sm:$0x1]
    %v64 = vlaneseq
    %v65 = vshrl.u32 %v64, 7
    %v66 = vsub.s32 0, %v65
    %v67 = vrot.slane %v62, %v66
    %v71 = vunpack.c.l.b16 %v44
    %v72 = vunpack.c.l.b16 %v45
    %v73 = vpack.c.b16 %v72, %v71
    %v91 = vunpack.c.l.b16 %v46
    %v92 = vunpack.c.l.b16 %v47
    %v93 = vunpack.c.l.b16 %v48
    %v94 = vunpack.c.l.b16 %v49
    %v95 = vunpack.c.l.b16 %v50
    %v96 = vunpack.c.l.b16 %v51
    %v97 = vunpack.c.l.b16 %v52
    %v98 = vunpack.c.l.b16 %v53
    %v99 = vunpack.c.l.b16 %v54
    %v100 = vunpack.c.l.b16 %v55
    %v101 = vunpack.c.l.b16 %v56
    %v102 = vunpack.c.l.b16 %v57
    %v103 = vunpack.c.l.b16 %v58
    %v104 = vunpack.c.l.b16 %v59
    %v105 = vunpack.c.l.b16 %v60
    %v106 = vunpack.c.l.b16 %v61
    %v107 = vpack.c.b16 %v92, %v91
    %v108 = vpack.c.b16 %v94, %v93
    %v109 = vpack.c.b16 %v96, %v95
    %v110 = vpack.c.b16 %v98, %v97
    %v111 = vpack.c.b16 %v100, %v99
    %v112 = vpack.c.b16 %v102, %v101
    %v113 = vpack.c.b16 %v104, %v103
    %v114 = vpack.c.b16 %v106, %v105
    %123 = vmatprep.subr.bf16.mxu0 0
    %124 = vmatpush1.bf16.msra.mxu0 %v114
    %125 = vmatprep.subr.bf16.mxu0 0
    %126 = vmatpush1.bf16.msra.mxu0 %v113
    %127 = vmatprep.subr.bf16.mxu0 0
    %128 = vmatpush1.bf16.msra.mxu0 %v112
    %129 = vmatprep.subr.bf16.mxu0 0
    %130 = vmatpush1.bf16.msra.mxu0 %v111
    %131 = vmatprep.subr.bf16.mxu0 0
    %132 = vmatpush1.bf16.msra.mxu0 %v110
    %133 = vmatprep.subr.bf16.mxu0 0
    %134 = vmatpush1.bf16.msra.mxu0 %v109
    %135 = vmatprep.subr.bf16.mxu0 0
    %136 = vmatpush1.bf16.msra.mxu0 %v108
    %137 = vmatprep.subr.bf16.mxu0 0
    %138 = vmatpush1.bf16.msra.mxu0 %v107
    %139 = vmatprep.subr.bf16.mxu0 0
    %140 = vmatpush2.bf16.msra.mxu0 0
    %141 = vmatprep.subr.bf16.mxu0 0
    %142 = vmatpush2.bf16.msra.mxu0 0
    %143 = vmatprep.subr.bf16.mxu0 0
    %144 = vmatpush2.bf16.msra.mxu0 0
    %145 = vmatprep.subr.bf16.mxu0 0
    %146 = vmatpush2.bf16.msra.mxu0 0
    %147 = vmatprep.subr.bf16.mxu0 0
    %148 = vmatpush2.bf16.msra.mxu0 0
    %149 = vmatprep.subr.bf16.mxu0 0
    %150 = vmatpush2.bf16.msra.mxu0 0
    %151 = vmatprep.subr.bf16.mxu0 0
    %152 = vmatpush2.bf16.msra.mxu0 0
    %153 = vmatprep.subr.bf16.mxu0 0
    %154 = vmatpush2.bf16.msra.mxu0 0
    %155 = vmatprep.mubr.bf16.mxu0 0
    %156 = vmatmul.mubr.bf16.gmra.mxu0 %v73
    %v157 = vpop.f32.mrf.mxu0
    %v158 = vadd.f32 %v67, %v157
    %v159 = vpop.f32.mrf.mxu0
    %v160 = vpop.f32.mrf.mxu0
    %v161 = vadd.f32 %v67, %v160
    %v162 = vpop.f32.mrf.mxu0
    %163 = vdwg.mxu0
    %v164 = vmax.f32 %v158, 0.0
    %v165 = vmax.f32 %v161, 0.0
    %166 = vst [vmem:[#allocation7] sm:$0xff] %v164
    %167 = vst [vmem:[#allocation7 + $0x8] sm:$0xff] %v165
    // Predicated region
    $region22: #{tpu_custom_call.1} parent=1 // pred_check
      _
    $region23: #{tpu_custom_call.1} parent=1 // pred_check_branch
      %169 = sbr.rel (0) target = $region25
    $region24: #{tpu_custom_call.1} parent=1 // pred_region
      %s171 = ssub.s32 256, 256
      %172 = vsyncadd [#allocation4], %s171
      %s173 = sshll.u32 [#allocation7], 4
      %s174 = int_to_ptr.vmem [resolvable:$true] %s173
      %179 = dma.vmem_to_hbm [thread:$0]  %s174, 256, %s3, [#allocation4], 128, 128, 8
    $region25: #{tpu_custom_call.1} parent=1 // pred_fallthru
      _
    // Predicated region
    $region26: #{tpu_custom_call.1} parent=1 // pred_check
      _
    $region27: #{tpu_custom_call.1} parent=1 // pred_check_branch
      %181 = sbr.rel (0) target = $region29
    $region28: #{tpu_custom_call.1} parent=1 // pred_region
      %182 = dma.done [#allocation4], 256
    $region29: #{tpu_custom_call.1} parent=1 // pred_fallthru
      _
    %183 = vsyncpa [#allocation3], 1
    %184 = vsyncpa [#allocation6], 1
    %185 = vsyncpa [#allocation4], 1

</llo_original>
